<compile_context>
chip_gen: v6e
topology: v6e:2x2x1
jax: 0.10.0
libtpu: 0.0.40
codegen_flags: <defaults>
</compile_context>

<pallas_src>
import jax
import jax.numpy as jnp
from jax.experimental import pallas as pl
from jax.experimental.pallas import tpu as pltpu


def _round_up(n, m):
    return pl.cdiv(n, m) * m


def _linear_bias_kernel(x_ref, w_ref, b_ref, o_ref):
    # MXU matmul with f32 accumulation; bias add rides the VPU slot while the
    # MXU / DMA dominate (free filler).  f32 epilogue also correct on v5e.
    acc = jnp.dot(x_ref[...], w_ref[...], preferred_element_type=jnp.float32)
    o_ref[...] = (acc + b_ref[...]).astype(o_ref.dtype)


def prepare_params(weight, bias):
    """One-time parameter prep, hoisted out of the per-call forward path.

    torch nn.Linear stores weight as (n_classes, latent_dim); the kernel wants
    it transposed and lane-dense (N padded up to a multiple of 128).
    """
    n_classes, latent_dim = weight.shape
    n_pad = _round_up(n_classes, 128)
    w_t = jnp.pad(weight.T, ((0, 0), (0, n_pad - n_classes)))            # (K, N_pad)
    b_p = jnp.pad(bias.reshape(1, -1), ((0, 0), (0, n_pad - n_classes)))  # (1, N_pad)
    return w_t, b_p


def single_layer_forward(x, w_t, b_p, *, n_classes, tm=512):
    """y = x @ weight.T + bias  (dropout=0 path of SingleLayer).

    x:   (batch, latent_dim)  -- unpadded activations.
    w_t: (latent_dim, n_pad)  -- pre-transposed, N-padded weight (prepare_params).
    b_p: (1, n_pad)           -- N-padded bias (prepare_params).
    """
    batch, k = x.shape
    n_pad = w_t.shape[1]

    flops = 2 * batch * k * n_pad
    bytes_accessed = (batch * k + k * n_pad + batch * n_pad + n_pad) * 4
    cost = pl.CostEstimate(flops=flops, transcendentals=0,
                           bytes_accessed=bytes_accessed)

    if batch <= tm:
        # Small-batch path: whole (unpadded-M/K, N-padded) problem resident in
        # VMEM.  Single DMA-in / one MXU pass / unmasked lane-dense store.
        y_p = pl.pallas_call(
            _linear_bias_kernel,
            out_shape=jax.ShapeDtypeStruct((batch, n_pad), x.dtype),
            in_specs=[
                pl.BlockSpec(memory_space=pltpu.MemorySpace.VMEM),  # x
                pl.BlockSpec(memory_space=pltpu.MemorySpace.VMEM),  # w_t
                pl.BlockSpec(memory_space=pltpu.MemorySpace.VMEM),  # bias
            ],
            out_specs=pl.BlockSpec(memory_space=pltpu.MemorySpace.VMEM),
            cost_estimate=cost,
        )(x, w_t, b_p)
    else:
        # Batched path: grid over M; auto-pipelining overlaps x-tile DMA with
        # the previous tile's matmul.  Weight / bias stay resident (constant
        # index_map).  K remains untiled while it fits VMEM.
        grid = (pl.cdiv(batch, tm),)
        # Spill-free VMEM sizing with 2x headroom: double-buffered x/out tiles
        # + resident weight/bias.  Comfortably under v7x's 64 MiB physical.
        vmem_bytes = 2 * (2 * (tm * k + tm * n_pad) + k * n_pad + n_pad) * 4
        vmem_limit = int(min(max(vmem_bytes, 16 << 20), 100 << 20))
        y_p = pl.pallas_call(
            _linear_bias_kernel,
            out_shape=jax.ShapeDtypeStruct((batch, n_pad), x.dtype),
            grid_spec=pltpu.PrefetchScalarGridSpec(
                num_scalar_prefetch=0,
                grid=grid,
                in_specs=[
                    pl.BlockSpec((tm, k), lambda i: (i, 0)),      # x tile
                    pl.BlockSpec((k, n_pad), lambda i: (0, 0)),   # resident W^T
                    pl.BlockSpec((1, n_pad), lambda i: (0, 0)),   # resident bias
                ],
                out_specs=pl.BlockSpec((tm, n_pad), lambda i: (i, 0)),
            ),
            compiler_params=pltpu.CompilerParams(
                # Independent M axis: v7x shards it across its 2 TensorCores;
                # harmless no-op on v5e/v6e (1 TC).
                dimension_semantics=("parallel",),
                vmem_limit_bytes=vmem_limit,
            ),
            cost_estimate=cost,
        )(x, w_t, b_p)

    # Strip the N padding outside the kernel (padded columns are exact zeros
    # of W / b and never alias valid outputs).
    return y_p[:, :n_classes]


if __name__ == "__main__":
    latent_dim = 32
    n_classes = 10
    batch = 8

    key = jax.random.PRNGKey(0)
    kx, kw, kb, kx2 = jax.random.split(key, 4)

    # Deterministic synthetic parameters with PyTorch nn.Linear shapes:
    # weight (n_classes, latent_dim), bias (n_classes,).
    bound = 1.0 / (latent_dim ** 0.5)
    weight = jax.random.uniform(
        kw, (n_classes, latent_dim), jnp.float32, -bound, bound
    )
    bias = jax.random.uniform(kb, (n_classes,), jnp.float32, -bound, bound)
    x = jax.random.normal(kx, (batch, latent_dim), jnp.float32)

    # One-time parameter prep (outside the per-call forward path).
    w_t, b_p = prepare_params(weight, bias)

    fwd = jax.jit(single_layer_forward, static_argnames=("n_classes", "tm"))

    # Small-batch path.
    y = jax.block_until_ready(fwd(x, w_t, b_p, n_classes=n_classes))
    y_ref = x @ weight.T + bias
    assert y.shape == (batch, n_classes)
    assert jnp.allclose(y, y_ref, atol=1e-5, rtol=1e-5), "small-path mismatch"

    # Batched path (grid over M, partial last tile) to exercise the pipelined
    # variant too.
    big_batch = 1000
    xb = jax.random.normal(kx2, (big_batch, latent_dim), jnp.float32)
    yb = jax.block_until_ready(fwd(xb, w_t, b_p, n_classes=n_classes))
    yb_ref = xb @ weight.T + bias
    assert yb.shape == (big_batch, n_classes)
    assert jnp.allclose(yb, yb_ref, atol=1e-5, rtol=1e-5), "batched-path mismatch"

    print("KERNEL_OK")
</pallas_src>

<mosaic_0001>
module attributes {stable_mosaic.version = 11 : i64} {
  func.func @_linear_bias_kernel(%arg0: memref<8x32xf32, #tpu.memory_space<vmem>>, %arg1: memref<32x128xf32, #tpu.memory_space<vmem>>, %arg2: memref<1x128xf32, #tpu.memory_space<vmem>>, %arg3: memref<8x128xf32, #tpu.memory_space<vmem>>) attributes {dimension_semantics = [], scalar_prefetch = 0 : i64, scratch_operands = 0 : i64, tpu.core_type = #tpu.core_type<tc>} {
    %c0 = arith.constant 0 : index
    %c0_0 = arith.constant 0 : index
    %0 = vector.load %arg0[%c0, %c0_0] : memref<8x32xf32, #tpu.memory_space<vmem>>, vector<8x32xf32>
    %c0_1 = arith.constant 0 : index
    %c0_2 = arith.constant 0 : index
    %1 = vector.load %arg1[%c0_1, %c0_2] : memref<32x128xf32, #tpu.memory_space<vmem>>, vector<32x128xf32>
    %cst = arith.constant dense<0.000000e+00> : vector<8x128xf32>
    %2 = tpu.matmul %0, %1, %cst {dimension_numbers = #tpu.dot_dimension_numbers<[1], [0], [0], [1], [0, 0, 1, 1], [], []>} : vector<8x32xf32>, vector<32x128xf32>, vector<8x128xf32> -> vector<8x128xf32>
    %c0_3 = arith.constant 0 : index
    %c0_4 = arith.constant 0 : index
    %3 = vector.load %arg2[%c0_3, %c0_4] : memref<1x128xf32, #tpu.memory_space<vmem>>, vector<1x128xf32>
    %4 = vector.broadcast %3 : vector<1x128xf32> to vector<8x128xf32>
    %5 = arith.addf %2, %4 : vector<8x128xf32>
    %c0_5 = arith.constant 0 : index
    %c0_6 = arith.constant 0 : index
    %6 = vector.load %arg3[%c0_5, %c0_6] : memref<8x128xf32, #tpu.memory_space<vmem>>, vector<8x128xf32>
    tpu.vector_store %arg3[%c0_5, %c0_6], %5 {strides = array<i32>} : memref<8x128xf32, #tpu.memory_space<vmem>>, vector<8x128xf32>,
    return
  }
}

</mosaic_0001>

<llo_original>
// kernel: single_layer_forward.1
$region0: #{single_layer_forward.1}
  #allocation0 [shape = 'u32[]', space=smem, size = 0x4, offset = 0x4, fixed_abs, tag = 'smem constant byte address 0x4 - core index']
  #allocation1 [shape = 'u32[144,128]{1,0:T(1,128)}', space=vmem, size = 0x12000, scoped, tag = 'internal scratch']
  %s0 = inlined_call_operand.hbm [shape: f32[8,32], index: 0, kind: input, shape index: {}]
  %s1 = inlined_call_operand.hbm [shape: f32[32,128], index: 1, kind: input, shape index: {}]
  %s2 = inlined_call_operand.vmem [shape: f32[1,128], index: 2, kind: input, shape index: {}]
  %s3 = inlined_call_operand.hbm [shape: f32[8,128], index: 3, kind: output, shape index: {}]
  %s4 = sld [smem:[#allocation0]]
  $region30: #{single_layer_forward.1} parent=0
    _
  %s6 = ssub.s32 1, %s4
  %s7 = scalar_select 0, %s6, %s4
  $region1: #{single_layer_forward.1} parent=0
    #allocation2 [shape = 'u8[4096]{0}', space=vmem, size = 0x1000, scoped, tag = 'input window, operand 0, single buffered']
    #allocation3 [shape = 's32[1]{0}', space=sflag, size = 0x4, scoped, tag = 'scoped memory for single_layer_forward.1']
    #allocation4 [shape = 's32[1]{0}', space=sflag, size = 0x4, scoped, tag = 'scoped memory for single_layer_forward.1']
    #allocation5 [shape = 'u8[16384]{0}', space=vmem, size = 0x4000, scoped, tag = 'input window, operand 1, single buffered']
    #allocation6 [shape = 's32[1]{0}', space=sflag, size = 0x4, scoped, tag = 'scoped memory for single_layer_forward.1']
    #allocation7 [shape = 'u8[4096]{0}', space=vmem, size = 0x1000, scoped, tag = 'output window, operand 0, single buffered']
    %8 = vsyncpa [#allocation3], 0
    %9 = vsyncpa [#allocation6], 0
    %10 = vsyncpa [#allocation4], 0
    // Predicated region
    $region2: #{single_layer_forward.1} parent=1 // pred_check
      _
    $region3: #{single_layer_forward.1} parent=1 // pred_check_branch
      %12 = sbr.rel (0) target = $region5
    $region4: #{single_layer_forward.1} parent=1 // pred_region
      %s14 = ssub.s32 128, 128
      %15 = vsyncadd [#allocation3], %s14
      %s17 = sshll.u32 [#allocation2], 4
      %s18 = int_to_ptr.vmem [resolvable:$true] %s17
      %20 = dma.hbm_to_vmem [thread:$0]  %s0, 128, %s18, [#allocation3]
    $region5: #{single_layer_forward.1} parent=1 // pred_fallthru
      _
    // Predicated region
    $region6: #{single_layer_forward.1} parent=1 // pred_check
      _
    $region7: #{single_layer_forward.1} parent=1 // pred_check_branch
      %22 = sbr.rel (0) target = $region9
    $region8: #{single_layer_forward.1} parent=1 // pred_region
      %s24 = ssub.s32 512, 512
      %25 = vsyncadd [#allocation6], %s24
      %s26 = sshll.u32 [#allocation5], 4
      %s27 = int_to_ptr.vmem [resolvable:$true] %s26
      %32 = dma.hbm_to_vmem [thread:$0]  %s1, 512, %s27, [#allocation6], 128, 128, 8
    $region9: #{single_layer_forward.1} parent=1 // pred_fallthru
      _
    // Predicated region
    $region10: #{single_layer_forward.1} parent=1 // pred_check
      _
    $region11: #{single_layer_forward.1} parent=1 // pred_check_branch
      %34 = sbr.rel (0) target = $region13
    $region12: #{single_layer_forward.1} parent=1 // pred_region
      _
    $region13: #{single_layer_forward.1} parent=1 // pred_fallthru
      _
    // Predicated region
    $region14: #{single_layer_forward.1} parent=1 // pred_check
      _
    $region15: #{single_layer_forward.1} parent=1 // pred_check_branch
      %36 = sbr.rel (0) target = $region17
    $region16: #{single_layer_forward.1} parent=1 // pred_region
      %37 = dma.done [#allocation3], 128
    $region17: #{single_layer_forward.1} parent=1 // pred_fallthru
      _
    // Predicated region
    $region18: #{single_layer_forward.1} parent=1 // pred_check
      _
    $region19: #{single_layer_forward.1} parent=1 // pred_check_branch
      %39 = sbr.rel (0) target = $region21
    $region20: #{single_layer_forward.1} parent=1 // pred_region
      %40 = dma.done [#allocation6], 512
    $region21: #{single_layer_forward.1} parent=1 // pred_fallthru
      _
    %v41 = vld [vmem:[#allocation2] sm:$0xff]
    %v42 = vld [vmem:[#allocation5] sm:$0xff]
    %v43 = vld [vmem:[#allocation5 + $0x8] sm:$0xff]
    %v44 = vld [vmem:[#allocation5 + $0x10] sm:$0xff]
    %v45 = vld [vmem:[#allocation5 + $0x18] sm:$0xff]
    %v46 = vld [vmem:[%s2] sm:$0x1]
    %v48 = vlaneseq
    %v49 = vshrl.u32 %v48, 7
    %v50 = vsub.s32 0, %v49
    %v51 = vrot.slane %v46, %v50
    %vm53 = vcmask 261120
    %v55 = vsel %vm53, %v41, 0
    %57 = vmatprep.subr.mxu0 0.0
    %58 = vmatpush1.msra.mxu0 0.0
    %59 = vmatprep.subr.mxu0 0.0
    %60 = vmatpush1.msra.mxu0 0.0
    %61 = vmatprep.subr.mxu0 0.0
    %62 = vmatpush1.msra.mxu0 0.0
    %63 = vmatprep.subr.mxu0 0.0
    %64 = vmatpush1.msra.mxu0 0.0
    %65 = vmatprep.subr.mxu0 0.0
    %66 = vmatpush1.msra.mxu0 0.0
    %67 = vmatprep.subr.mxu0 0.0
    %68 = vmatpush1.msra.mxu0 0.0
    %69 = vmatprep.subr.mxu0 0.0
    %70 = vmatpush1.msra.mxu0 0.0
    %71 = vmatprep.subr.mxu0 0.0
    %72 = vmatpush1.msra.mxu0 0.0
    %73 = vmatprep.subr.mxu0 0.0
    %74 = vmatpush1.msra.mxu0 0.0
    %75 = vmatprep.subr.mxu0 0.0
    %76 = vmatpush1.msra.mxu0 0.0
    %77 = vmatprep.subr.mxu0 0.0
    %78 = vmatpush1.msra.mxu0 0.0
    %79 = vmatprep.subr.mxu0 0.0
    %80 = vmatpush1.msra.mxu0 0.0
    %81 = vmatprep.subr.mxu0 0.0
    %82 = vmatpush1.msra.mxu0 %v45
    %83 = vmatprep.subr.mxu0 0.0
    %84 = vmatpush1.msra.mxu0 %v44
    %85 = vmatprep.subr.mxu0 0.0
    %86 = vmatpush1.msra.mxu0 %v43
    %87 = vmatprep.subr.mxu0 0.0
    %88 = vmatpush1.msra.mxu0 %v42
    %89 = vmatprep.subr.mxu0 0.0
    %90 = vmatpush2.msra.mxu0 0.0
    %91 = vmatprep.subr.mxu0 0.0
    %92 = vmatpush2.msra.mxu0 0.0
    %93 = vmatprep.subr.mxu0 0.0
    %94 = vmatpush2.msra.mxu0 0.0
    %95 = vmatprep.subr.mxu0 0.0
    %96 = vmatpush2.msra.mxu0 0.0
    %97 = vmatprep.subr.mxu0 0.0
    %98 = vmatpush2.msra.mxu0 0.0
    %99 = vmatprep.subr.mxu0 0.0
    %100 = vmatpush2.msra.mxu0 0.0
    %101 = vmatprep.subr.mxu0 0.0
    %102 = vmatpush2.msra.mxu0 0.0
    %103 = vmatprep.subr.mxu0 0.0
    %104 = vmatpush2.msra.mxu0 0.0
    %105 = vmatprep.subr.mxu0 0.0
    %106 = vmatpush2.msra.mxu0 0.0
    %107 = vmatprep.subr.mxu0 0.0
    %108 = vmatpush2.msra.mxu0 0.0
    %109 = vmatprep.subr.mxu0 0.0
    %110 = vmatpush2.msra.mxu0 0.0
    %111 = vmatprep.subr.mxu0 0.0
    %112 = vmatpush2.msra.mxu0 0.0
    %113 = vmatprep.subr.mxu0 0.0
    %114 = vmatpush2.msra.mxu0 0.0
    %115 = vmatprep.subr.mxu0 0.0
    %116 = vmatpush2.msra.mxu0 0.0
    %117 = vmatprep.subr.mxu0 0.0
    %118 = vmatpush2.msra.mxu0 0.0
    %119 = vmatprep.subr.mxu0 0.0
    %120 = vmatpush2.msra.mxu0 0.0
    %121 = vmatprep.mubr.f32.mxu0 0.0
    %122 = vmatmul.mubr.f32.gmra.mxu0 %v55
    %v123 = vpop.f32.mrf.mxu0
    %v124 = vadd.f32 %v51, %v123
    %v125 = vpop.f32.mrf.mxu0
    %126 = vdwg.mxu0
    %127 = vst [vmem:[#allocation7] sm:$0xff] %v124
    // Predicated region
    $region22: #{single_layer_forward.1} parent=1 // pred_check
      _
    $region23: #{single_layer_forward.1} parent=1 // pred_check_branch
      %129 = sbr.rel (0) target = $region25
    $region24: #{single_layer_forward.1} parent=1 // pred_region
      %s131 = ssub.s32 128, 128
      %132 = vsyncadd [#allocation4], %s131
      %s134 = sshll.u32 [#allocation7], 4
      %s135 = int_to_ptr.vmem [resolvable:$true] %s134
      %137 = dma.vmem_to_hbm [thread:$0]  %s135, 128, %s3, [#allocation4]
    $region25: #{single_layer_forward.1} parent=1 // pred_fallthru
      _
    // Predicated region
    $region26: #{single_layer_forward.1} parent=1 // pred_check
      _
    $region27: #{single_layer_forward.1} parent=1 // pred_check_branch
      %139 = sbr.rel (0) target = $region29
    $region28: #{single_layer_forward.1} parent=1 // pred_region
      %140 = dma.done [#allocation4], 128
    $region29: #{single_layer_forward.1} parent=1 // pred_fallthru
      _
    %141 = vsyncpa [#allocation3], 1
    %142 = vsyncpa [#allocation6], 1
    %143 = vsyncpa [#allocation4], 1

</llo_original>
